<compile_context>
chip_gen: v7x
topology: tpu7x:2x2x1
jax: 0.10.0
libtpu: 0.0.40
codegen_flags: <defaults>
</compile_context>

<pallas_src>
import functools

import jax
import jax.numpy as jnp
from jax.experimental import pallas as pl
from jax.experimental.pallas import tpu as pltpu


_NEG_PAD = -1.0e30  # finite "minus infinity" for padded class columns


def _softmaxplus_kernel(y_ref, labels_ref, logits_ref, nll_ref, *, inv_temp):
    """One row-tile: softmax(y) and per-row NLL of (y * inv_temp, labels)."""
    y = y_ref[...].astype(jnp.float32)                       # (T, C)

    # ---- softmax(y, dim=1) -> logits ----
    m = jnp.max(y, axis=1, keepdims=True)                    # (T, 1)
    e = jnp.exp(y - m)
    s = jnp.sum(e, axis=1, keepdims=True)
    logits_ref[...] = (e * pl.reciprocal(s, approx=True)).astype(logits_ref.dtype)

    # ---- per-row NLL of (y / temp, labels) ----
    # Reuse the softmax max: max(y * inv_temp) == max(y) * inv_temp (temp > 0).
    ys = y * inv_temp
    ms = m * inv_temp
    lse = jnp.log(jnp.sum(jnp.exp(ys - ms), axis=1, keepdims=True)) + ms  # (T, 1)

    labels = labels_ref[...]                                  # (T, 1) int32
    cls_ids = jax.lax.broadcasted_iota(jnp.int32, ys.shape, 1)
    picked = jnp.sum(jnp.where(cls_ids == labels, ys, 0.0),
                     axis=1, keepdims=True)                   # (T, 1)

    nll_ref[...] = lse - picked                               # (T, 1) f32


def _softmax_kernel(y_ref, logits_ref):
    """Softmax-only variant for the labels=None path."""
    y = y_ref[...].astype(jnp.float32)
    m = jnp.max(y, axis=1, keepdims=True)
    e = jnp.exp(y - m)
    s = jnp.sum(e, axis=1, keepdims=True)
    logits_ref[...] = (e * pl.reciprocal(s, approx=True)).astype(logits_ref.dtype)


def _round_up(x, mult):
    return pl.cdiv(x, mult) * mult


def _choose_block_rows(n, c_pad, in_bytes, out_bytes, budget_bytes=24 << 20):
    """Largest multiple-of-8 row tile whose double-buffered working set fits."""
    per_row = c_pad * (in_bytes + out_bytes) + 8  # + labels (i32) + nll (f32)
    rows = budget_bytes // (2 * per_row)          # x2 for double buffering
    n8 = _round_up(n, 8)
    rows = max(8, min(int(rows), 1024, int(n8)))
    return max(8, (rows // 8) * 8)


def softmax_plus_forward(x, y, labels=None, *, temp=2.0, block_rows=None):
    """Mirrors SoftmaxPlus.forward; `x` is unused (as in the PyTorch module)."""
    del x
    n, c = y.shape
    out_dtype = y.dtype

    # --- padding: lane-dense class dim (multiple of 128), rows to tile size ---
    c_pad = int(_round_up(c, 128))
    if block_rows is None:
        block_rows = _choose_block_rows(n, c_pad, y.dtype.itemsize,
                                        jnp.dtype(out_dtype).itemsize)
    block_rows = max(8, (int(block_rows) // 8) * 8)
    n_pad = int(_round_up(n, block_rows))

    y_p = y
    if c_pad != c:
        y_p = jnp.pad(y_p, ((0, 0), (0, c_pad - c)), constant_values=_NEG_PAD)
    if n_pad != n:
        y_p = jnp.pad(y_p, ((0, n_pad - n), (0, 0)), constant_values=0.0)

    grid = (n_pad // block_rows,)
    compiler_params = pltpu.CompilerParams(
        dimension_semantics=("parallel",),
        vmem_limit_bytes=64 << 20,
    )

    if labels is None:
        logits_p = pl.pallas_call(
            _softmax_kernel,
            out_shape=jax.ShapeDtypeStruct((n_pad, c_pad), out_dtype),
            grid_spec=pltpu.PrefetchScalarGridSpec(
                num_scalar_prefetch=0,
                grid=grid,
                in_specs=[pl.BlockSpec((block_rows, c_pad), lambda i: (i, 0))],
                out_specs=pl.BlockSpec((block_rows, c_pad), lambda i: (i, 0)),
            ),
            compiler_params=compiler_params,
        )(y_p)
        return logits_p[:n, :c], 0

    labels_p = labels.astype(jnp.int32).reshape(n, 1)
    if n_pad != n:
        labels_p = jnp.pad(labels_p, ((0, n_pad - n), (0, 0)), constant_values=0)

    kernel = functools.partial(_softmaxplus_kernel, inv_temp=1.0 / float(temp))

    logits_p, nll_p = pl.pallas_call(
        kernel,
        out_shape=(
            jax.ShapeDtypeStruct((n_pad, c_pad), out_dtype),
            jax.ShapeDtypeStruct((n_pad, 1), jnp.float32),
        ),
        grid_spec=pltpu.PrefetchScalarGridSpec(
            num_scalar_prefetch=0,
            grid=grid,
            in_specs=[
                pl.BlockSpec((block_rows, c_pad), lambda i: (i, 0)),
                pl.BlockSpec((block_rows, 1), lambda i: (i, 0)),
            ],
            out_specs=(
                pl.BlockSpec((block_rows, c_pad), lambda i: (i, 0)),
                pl.BlockSpec((block_rows, 1), lambda i: (i, 0)),
            ),
        ),
        compiler_params=compiler_params,
    )(y_p, labels_p)

    loss = jnp.mean(nll_p[:n, 0])
    return logits_p[:n, :c], loss


if __name__ == "__main__":
    key = jax.random.PRNGKey(0)
    kx, ky, kl = jax.random.split(key, 3)

    N, C, D = 64, 128, 32
    TEMP = 2.0

    x = jax.random.normal(kx, (N, D), dtype=jnp.float32)      # unused by forward
    y = jax.random.normal(ky, (N, C), dtype=jnp.float32)      # raw class scores
    labels = jax.random.randint(kl, (N,), 0, C, dtype=jnp.int32)

    # Force several grid steps to exercise the pipelined (tiled) path.
    logits, loss = softmax_plus_forward(x, y, labels, temp=TEMP, block_rows=16)
    jax.block_until_ready((logits, loss))

    # Pure-JAX reference check (approx reciprocal -> loosened logits tolerance).
    ref_logits = jax.nn.softmax(y, axis=1)
    ys_ref = y / TEMP
    ref_loss = jnp.mean(
        jax.nn.logsumexp(ys_ref, axis=1)
        - jnp.take_along_axis(ys_ref, labels[:, None], axis=1)[:, 0]
    )
    assert jnp.allclose(logits, ref_logits, atol=5e-3, rtol=5e-3)
    assert jnp.allclose(loss, ref_loss, atol=1e-4, rtol=1e-4)

    # labels=None path (softmax-only kernel).
    logits_only, zero = softmax_plus_forward(x, y, None, temp=TEMP, block_rows=16)
    jax.block_until_ready(logits_only)
    assert zero == 0
    assert jnp.allclose(logits_only, ref_logits, atol=5e-3, rtol=5e-3)

    # Non-aligned shapes exercise the row/class padding path.
    N2, C2 = 10, 100
    ky2, kl2 = jax.random.split(ky)
    y2 = jax.random.normal(ky2, (N2, C2), dtype=jnp.float32)
    labels2 = jax.random.randint(kl2, (N2,), 0, C2, dtype=jnp.int32)
    logits2, loss2 = softmax_plus_forward(None, y2, labels2, temp=TEMP)
    jax.block_until_ready((logits2, loss2))
    ref_logits2 = jax.nn.softmax(y2, axis=1)
    ys2 = y2 / TEMP
    ref_loss2 = jnp.mean(
        jax.nn.logsumexp(ys2, axis=1)
        - jnp.take_along_axis(ys2, labels2[:, None], axis=1)[:, 0]
    )
    assert logits2.shape == (N2, C2)
    assert jnp.allclose(logits2, ref_logits2, atol=5e-3, rtol=5e-3)
    assert jnp.allclose(loss2, ref_loss2, atol=1e-4, rtol=1e-4)

    print("KERNEL_OK")
</pallas_src>

<mosaic_0001>
module attributes {stable_mosaic.version = 11 : i64} {
  func.func @_softmaxplus_kernel(%arg0: i32, %arg1: memref<16x128xf32, #tpu.memory_space<vmem>>, %arg2: memref<16x1xi32, #tpu.memory_space<vmem>>, %arg3: memref<16x128xf32, #tpu.memory_space<vmem>>, %arg4: memref<16x1xf32, #tpu.memory_space<vmem>>) attributes {dimension_semantics = [#tpu.dimension_semantics<parallel>], iteration_bounds = array<i64: 4>, scalar_prefetch = 0 : i64, scratch_operands = 0 : i64, tpu.core_type = #tpu.core_type<tc>, window_params = [{transform_indices = @transform_0, window_bounds = array<i64: 16, 128>}, {transform_indices = @transform_1, window_bounds = array<i64: 16, 1>}, {transform_indices = @transform_2, window_bounds = array<i64: 16, 128>}, {transform_indices = @transform_3, window_bounds = array<i64: 16, 1>}]} {
    %c0 = arith.constant 0 : index
    %c0_0 = arith.constant 0 : index
    %0 = vector.load %arg1[%c0, %c0_0] : memref<16x128xf32, #tpu.memory_space<vmem>>, vector<16x128xf32>
    %cst = arith.constant dense<0xFF800000> : vector<16xf32>
    %1 = vector.multi_reduction <maximumf>, %0, %cst [1] : vector<16x128xf32> to vector<16xf32>
    %2 = vector.shape_cast %1 : vector<16xf32> to vector<16x1xf32>
    %3 = vector.broadcast %2 : vector<16x1xf32> to vector<16x128xf32>
    %4 = arith.subf %0, %3 : vector<16x128xf32>
    %5 = math.exp %4 : vector<16x128xf32>
    %cst_1 = arith.constant dense<0.000000e+00> : vector<16xf32>
    %6 = vector.multi_reduction <add>, %5, %cst_1 [1] : vector<16x128xf32> to vector<16xf32>
    %7 = vector.shape_cast %6 : vector<16xf32> to vector<16x1xf32>
    %8 = tpu.reciprocal %7 {approx = true} : vector<16x1xf32> -> vector<16x1xf32>
    %9 = vector.broadcast %8 : vector<16x1xf32> to vector<16x128xf32>
    %10 = arith.mulf %5, %9 : vector<16x128xf32>
    %c0_2 = arith.constant 0 : index
    %c0_3 = arith.constant 0 : index
    %11 = vector.load %arg3[%c0_2, %c0_3] : memref<16x128xf32, #tpu.memory_space<vmem>>, vector<16x128xf32>
    tpu.vector_store %arg3[%c0_2, %c0_3], %10 {strides = array<i32>} : memref<16x128xf32, #tpu.memory_space<vmem>>, vector<16x128xf32>,
    %cst_4 = arith.constant 5.000000e-01 : f32
    %12 = vector.broadcast %cst_4 : f32 to vector<16x128xf32>
    %13 = arith.mulf %0, %12 : vector<16x128xf32>
    %cst_5 = arith.constant 5.000000e-01 : f32
    %14 = vector.broadcast %cst_5 : f32 to vector<16x1xf32>
    %15 = arith.mulf %2, %14 : vector<16x1xf32>
    %16 = vector.broadcast %15 : vector<16x1xf32> to vector<16x128xf32>
    %17 = arith.subf %13, %16 : vector<16x128xf32>
    %18 = math.exp %17 : vector<16x128xf32>
    %cst_6 = arith.constant dense<0.000000e+00> : vector<16xf32>
    %19 = vector.multi_reduction <add>, %18, %cst_6 [1] : vector<16x128xf32> to vector<16xf32>
    %20 = vector.shape_cast %19 : vector<16xf32> to vector<16x1xf32>
    %21 = math.log %20 : vector<16x1xf32>
    %22 = arith.addf %21, %15 : vector<16x1xf32>
    %c0_7 = arith.constant 0 : index
    %c0_8 = arith.constant 0 : index
    %23 = vector.load %arg2[%c0_7, %c0_8] : memref<16x1xi32, #tpu.memory_space<vmem>>, vector<16x1xi32>
    %24 = tpu.iota {dimensions = array<i32: 1>} : vector<16x128xi32>
    %25 = vector.broadcast %23 : vector<16x1xi32> to vector<16x128xi32>
    %26 = arith.cmpi eq, %24, %25 : vector<16x128xi32>
    %cst_9 = arith.constant 0.000000e+00 : f32
    %27 = vector.broadcast %cst_9 : f32 to vector<16x128xf32>
    %28 = arith.select %26, %13, %27 : vector<16x128xi1>, vector<16x128xf32>
    %cst_10 = arith.constant dense<0.000000e+00> : vector<16xf32>
    %29 = vector.multi_reduction <add>, %28, %cst_10 [1] : vector<16x128xf32> to vector<16xf32>
    %30 = vector.shape_cast %29 : vector<16xf32> to vector<16x1xf32>
    %31 = arith.subf %22, %30 : vector<16x1xf32>
    %c0_11 = arith.constant 0 : index
    %c0_12 = arith.constant 0 : index
    %32 = vector.load %arg4[%c0_11, %c0_12] : memref<16x1xf32, #tpu.memory_space<vmem>>, vector<16x1xf32>
    tpu.vector_store %arg4[%c0_11, %c0_12], %31 {strides = array<i32>} : memref<16x1xf32, #tpu.memory_space<vmem>>, vector<16x1xf32>,
    return
  }
  func.func @transform_0(%arg0: i32) -> (i32, i32) {
    %c0_i32 = arith.constant 0 : i32
    %c0_i32_0 = arith.constant 0 : i32
    return %arg0, %c0_i32 : i32, i32
  }
  func.func @transform_1(%arg0: i32) -> (i32, i32) {
    %c0_i32 = arith.constant 0 : i32
    %c0_i32_0 = arith.constant 0 : i32
    return %arg0, %c0_i32 : i32, i32
  }
  func.func @transform_2(%arg0: i32) -> (i32, i32) {
    %c0_i32 = arith.constant 0 : i32
    %c0_i32_0 = arith.constant 0 : i32
    return %arg0, %c0_i32 : i32, i32
  }
  func.func @transform_3(%arg0: i32) -> (i32, i32) {
    %c0_i32 = arith.constant 0 : i32
    %c0_i32_0 = arith.constant 0 : i32
    return %arg0, %c0_i32 : i32, i32
  }
}

</mosaic_0001>

<llo_original>
// kernel: tpu_custom_call.1
$region0: #{tpu_custom_call.1}
  #allocation0 [shape = 'u32[]', space=smem, size = 0x4, offset = 0x4, fixed_abs, tag = 'smem constant byte address 0x4 - core index']
  #allocation1 [shape = 'u32[144,128]{1,0:T(1,128)}', space=vmem, size = 0x12000, scoped, tag = 'internal scratch']
  %s0 = inlined_call_operand.hbm [shape: f32[64,128], index: 0, kind: input, shape index: {}]
  %s1 = inlined_call_operand.hbm [shape: s32[64,1], index: 1, kind: input, shape index: {}]
  %s2 = inlined_call_operand.hbm [shape: f32[64,128], index: 2, kind: output, shape index: {0}]
  %s3 = inlined_call_operand.hbm [shape: f32[64,1], index: 3, kind: output, shape index: {1}]
  %4 = xla_tuple %s2, %s3
  %s5 = sld [smem:[#allocation0]]
  $region57: #{tpu_custom_call.1} parent=0
    _
  %s7 = ssub.s32 1, %s5
  %s8 = scalar_select 0, %s7, %s5
  $region1: #{tpu_custom_call.1} parent=0
    #allocation2 [shape = 'u8[16384]{0}', space=vmem, size = 0x4000, scoped, tag = 'input window, operand 0']
    #allocation3 [shape = 's32[2]{0}', space=sflag, size = 0x8, scoped, tag = 'scoped memory for tpu_custom_call.1']
    #allocation4 [shape = 's32[2]{0}', space=sflag, size = 0x8, scoped, tag = 'scoped memory for tpu_custom_call.1']
    #allocation5 [shape = 'u8[16384]{0}', space=vmem, size = 0x4000, scoped, tag = 'input window, operand 1']
    #allocation6 [shape = 's32[2]{0}', space=sflag, size = 0x8, scoped, tag = 'scoped memory for tpu_custom_call.1']
    #allocation7 [shape = 'u8[16384]{0}', space=vmem, size = 0x4000, scoped, tag = 'output window, operand 0']
    #allocation8 [shape = 'u8[16384]{0}', space=vmem, size = 0x4000, scoped, tag = 'output window, operand 1']
    #allocation9 [shape = 's32[2]{0}', space=sflag, size = 0x8, scoped, tag = 'scoped memory for tpu_custom_call.1']
    %9 = vsyncpa [#allocation3], 0
    %s10 = scalar_lea.sflag [#allocation3], 1
    %11 = vsyncpa %s10, 0
    %12 = vsyncpa [#allocation6], 0
    %s13 = scalar_lea.sflag [#allocation6], 1
    %14 = vsyncpa %s13, 0
    %15 = vsyncpa [#allocation4], 0
    %s16 = scalar_lea.sflag [#allocation4], 1
    %17 = vsyncpa %s16, 0
    %18 = vsyncpa [#allocation9], 0
    %s19 = scalar_lea.sflag [#allocation9], 1
    %20 = vsyncpa %s19, 0
    loop: start=0, step=1, limit=6
    $region2: #{tpu_custom_call.1} parent=1 // loop_pre_header
      _
    $region3: #{tpu_custom_call.1} parent=1 // loop_header
      %s22 = sphi 0, %s26
      %p23 = scmp.ge.s32.totalorder %s22, 6
      %s32 = sphi 0, %s34
      %s35 = sphi 0, %s32
      %s36 = sphi 0, %s35
      %s52 = sphi 0, %s36
      %s58 = sphi 0, %s60
      %s61 = sphi 0, %s58
      %s62 = sphi 0, %s61
      %s78 = sphi 0, %s62
      %s84 = sphi 0, %s86
      %s87 = sphi 0, %s84
      %s88 = sphi 0, %s87
      %s104 = sphi 0, %s88
      %s110 = sphi 0, %s112
      %s113 = sphi 0, %s110
      %s114 = sphi 0, %s113
      %s130 = sphi 0, %s114
    $region4: #{tpu_custom_call.1} parent=1 // loop_header_branch
      %25 = sbr.rel (%p23) target = $region8
    $region5: #{tpu_custom_call.1} parent=1 // loop_body
      %s27 = ssub.s32 %s22, 1
      %s28 = ssub.s32 %s22, 2
      %s29 = sadd.s32 %s22, 1
      %s30 = ssub.s32 %s22, %s29
      %p31 = scmp.eq.s32.totalorder %s30, 0
      %s33 = sadd.s32 %s32, 1
      %s34 = scalar_select %p31, %s32, %s33
      %p37 = pneg %p31
      %p38 = scmp.eq.s32.totalorder %s22, 3
      %p39 = por %p37, %p38
      %p40 = scmp.ne.s32.totalorder %s32, %s35
      %p41 = scmp.eq.s32.totalorder %s22, 0
      %p42 = por %p40, %p41
      %p43 = scmp.ne.s32.totalorder %s32, %s35
      %p44 = scmp.eq.s32.totalorder %s27, 3
      %p45 = por %p43, %p44
      %p46 = scmp.ne.s32.totalorder %s35, %s36
      %p47 = scmp.eq.s32.totalorder %s27, 0
      %p48 = por %p46, %p47
      %p49 = scmp.ne.s32.totalorder %s35, %s36
      %p50 = scmp.eq.s32.totalorder %s28, 3
      %p51 = por %p49, %p50
      %p53 = scmp.ne.s32.totalorder %s36, %s52
      %p54 = scmp.eq.s32.totalorder %s28, 0
      %p55 = por %p53, %p54
      %s56 = ssub.s32 %s22, %s29
      %p57 = scmp.eq.s32.totalorder %s56, 0
      %s59 = sadd.s32 %s58, 1
      %s60 = scalar_select %p57, %s58, %s59
      %p63 = pneg %p57
      %p64 = scmp.eq.s32.totalorder %s22, 3
      %p65 = por %p63, %p64
      %p66 = scmp.ne.s32.totalorder %s58, %s61
      %p67 = scmp.eq.s32.totalorder %s22, 0
      %p68 = por %p66, %p67
      %p69 = scmp.ne.s32.totalorder %s58, %s61
      %p70 = scmp.eq.s32.totalorder %s27, 3
      %p71 = por %p69, %p70
      %p72 = scmp.ne.s32.totalorder %s61, %s62
      %p73 = scmp.eq.s32.totalorder %s27, 0
      %p74 = por %p72, %p73
      %p75 = scmp.ne.s32.totalorder %s61, %s62
      %p76 = scmp.eq.s32.totalorder %s28, 3
      %p77 = por %p75, %p76
      %p79 = scmp.ne.s32.totalorder %s62, %s78
      %p80 = scmp.eq.s32.totalorder %s28, 0
      %p81 = por %p79, %p80
      %s82 = ssub.s32 %s22, %s29
      %p83 = scmp.eq.s32.totalorder %s82, 0
      %s85 = sadd.s32 %s84, 1
      %s86 = scalar_select %p83, %s84, %s85
      %p89 = pneg %p83
      %p90 = scmp.eq.s32.totalorder %s22, 3
      %p91 = por %p89, %p90
      %p92 = scmp.ne.s32.totalorder %s84, %s87
      %p93 = scmp.eq.s32.totalorder %s22, 0
      %p94 = por %p92, %p93
      %p95 = scmp.ne.s32.totalorder %s84, %s87
      %p96 = scmp.eq.s32.totalorder %s27, 3
      %p97 = por %p95, %p96
      %p98 = scmp.ne.s32.totalorder %s87, %s88
      %p99 = scmp.eq.s32.totalorder %s27, 0
      %p100 = por %p98, %p99
      %p101 = scmp.ne.s32.totalorder %s87, %s88
      %p102 = scmp.eq.s32.totalorder %s28, 3
      %p103 = por %p101, %p102
      %p105 = scmp.ne.s32.totalorder %s88, %s104
      %p106 = scmp.eq.s32.totalorder %s28, 0
      %p107 = por %p105, %p106
      %s108 = ssub.s32 %s22, %s29
      %p109 = scmp.eq.s32.totalorder %s108, 0
      %s111 = sadd.s32 %s110, 1
      %s112 = scalar_select %p109, %s110, %s111
      %p115 = pneg %p109
      %p116 = scmp.eq.s32.totalorder %s22, 3
      %p117 = por %p115, %p116
      %p118 = scmp.ne.s32.totalorder %s110, %s113
      %p119 = scmp.eq.s32.totalorder %s22, 0
      %p120 = por %p118, %p119
      %p121 = scmp.ne.s32.totalorder %s110, %s113
      %p122 = scmp.eq.s32.totalorder %s27, 3
      %p123 = por %p121, %p122
      %p124 = scmp.ne.s32.totalorder %s113, %s114
      %p125 = scmp.eq.s32.totalorder %s27, 0
      %p126 = por %p124, %p125
      %p127 = scmp.ne.s32.totalorder %s113, %s114
      %p128 = scmp.eq.s32.totalorder %s28, 3
      %p129 = por %p127, %p128
      %p131 = scmp.ne.s32.totalorder %s114, %s130
      %p132 = scmp.eq.s32.totalorder %s28, 0
      %p133 = por %p131, %p132
      %p134 = scmp.le.s32.totalorder 1, %s22
      %p135 = scmp.lt.s32.totalorder %s22, 5
      %p136 = pnand %p134, %p135
      %p137 = pneg %p136
      // Predicated region
      $region9: #{tpu_custom_call.1} parent=5 // pred_check
        _
      $region10: #{tpu_custom_call.1} parent=5 // pred_check_branch
        %139 = sbr.rel (%p136) target = $region12
      $region11: #{tpu_custom_call.1} parent=5 // pred_region
        %s140 = ssub.s32 %s22, 1
      $region12: #{tpu_custom_call.1} parent=5 // pred_fallthru
        _
      %p141 = scmp.lt.s32.totalorder %s22, 4
      // Predicated region
      $region13: #{tpu_custom_call.1} parent=5 // pred_check
        %p142 = pneg %p141
      $region14: #{tpu_custom_call.1} parent=5 // pred_check_branch
        %144 = sbr.rel (%p142) target = $region16
      $region15: #{tpu_custom_call.1} parent=5 // pred_region
        // Predicated region
        $region17: #{tpu_custom_call.1} parent=15 // pred_check
          %p145 = pneg %p42
        $region18: #{tpu_custom_call.1} parent=15 // pred_check_branch
          %147 = sbr.rel (%p145) target = $region20
        $region19: #{tpu_custom_call.1} parent=15 // pred_region
          %s148 = sand.u32 %s32, 1
          %s149 = scalar_lea.sflag [#allocation3], %s148
          %s150 = sand.u32 %s32, 1
          %s151 = smul.addr %s150, 16
          %s152 = scalar_lea.vmem [#allocation2], %s151
          %s153 = smul.u32 2, %s22
          %s155 = ssub.s32 256, 256
          %156 = vsyncadd %s149, %s155
          %s157 = smul.addr %s153, 128
          %s158 = scalar_lea.hbm %s0, %s157
          %s159 = sshll.u32 %s152, 4
          %s160 = int_to_ptr.vmem [resolvable:$true] %s159
          %165 = dma.hbm_to_vmem [thread:$0]  %s158, 256, %s160, %s149, 128, 128, 8
        $region20: #{tpu_custom_call.1} parent=15 // pred_fallthru
          _
        // Predicated region
        $region21: #{tpu_custom_call.1} parent=15 // pred_check
          %p166 = pneg %p68
        $region22: #{tpu_custom_call.1} parent=15 // pred_check_branch
          %168 = sbr.rel (%p166) target = $region24
        $region23: #{tpu_custom_call.1} parent=15 // pred_region
          %s169 = sand.u32 %s58, 1
          %s170 = scalar_lea.sflag [#allocation6], %s169
          %s171 = sand.u32 %s58, 1
          %s172 = smul.addr %s171, 16
          %s173 = scalar_lea.vmem [#allocation5], %s172
          %s174 = smul.u32 2, %s22
          %s176 = ssub.s32 256, 256
          %177 = vsyncadd %s170, %s176
          %s178 = smul.addr %s174, 128
          %s179 = scalar_lea.hbm %s1, %s178
          %s180 = sshll.u32 %s173, 4
          %s181 = int_to_ptr.vmem [resolvable:$true] %s180
          %186 = dma.hbm_to_vmem [thread:$0]  %s179, 256, %s181, %s170, 128, 128, 8
        $region24: #{tpu_custom_call.1} parent=15 // pred_fallthru
          _
      $region16: #{tpu_custom_call.1} parent=5 // pred_fallthru
        _
      %p187 = scmp.le.s32.totalorder 1, %s22
      %p188 = scmp.lt.s32.totalorder %s22, 5
      %p189 = pnand %p187, %p188
      %p190 = pneg %p189
      // Predicated region
      $region25: #{tpu_custom_call.1} parent=5 // pred_check
        _
      $region26: #{tpu_custom_call.1} parent=5 // pred_check_branch
        %192 = sbr.rel (%p189) target = $region28
      $region27: #{tpu_custom_call.1} parent=5 // pred_region
        %s193 = ssub.s32 %s22, 1
        %s194 = sand.u32 %s35, 1
        %s195 = scalar_lea.sflag [#allocation3], %s194
        %s196 = sand.u32 %s35, 1
        %s197 = smul.addr %s196, 16
        %s198 = scalar_lea.vmem [#allocation2], %s197
        // Predicated region
        $region29: #{tpu_custom_call.1} parent=27 // pred_check
          %p199 = pneg %p48
        $region30: #{tpu_custom_call.1} parent=27 // pred_check_branch
          %201 = sbr.rel (%p199) target = $region32
        $region31: #{tpu_custom_call.1} parent=27 // pred_region
          %202 = dma.done %s195, 256
        $region32: #{tpu_custom_call.1} parent=27 // pred_fallthru
          _
        %s203 = sand.u32 %s61, 1
        %s204 = scalar_lea.sflag [#allocation6], %s203
        %s205 = sand.u32 %s61, 1
        %s206 = smul.addr %s205, 16
        %s207 = scalar_lea.vmem [#allocation5], %s206
        // Predicated region
        $region33: #{tpu_custom_call.1} parent=27 // pred_check
          %p208 = pneg %p74
        $region34: #{tpu_custom_call.1} parent=27 // pred_check_branch
          %210 = sbr.rel (%p208) target = $region36
        $region35: #{tpu_custom_call.1} parent=27 // pred_region
          %211 = dma.done %s204, 256
        $region36: #{tpu_custom_call.1} parent=27 // pred_fallthru
          _
        %s212 = sand.u32 %s35, 1
        %s213 = scalar_lea.sflag [#allocation3], %s212
        %s214 = sand.u32 %s35, 1
        %s215 = smul.addr %s214, 16
        %s216 = scalar_lea.vmem [#allocation2], %s215
        %p217 = pneg %p48
        %p218 = pneg %p45
        %s219 = sand.u32 %s61, 1
        %s220 = scalar_lea.sflag [#allocation6], %s219
        %s221 = sand.u32 %s61, 1
        %s222 = smul.addr %s221, 16
        %s223 = scalar_lea.vmem [#allocation5], %s222
        %p224 = pneg %p74
        %p225 = pneg %p71
        %p226 = pneg %p100
        %p227 = pneg %p97
        %s228 = sand.u32 %s87, 1
        %s229 = scalar_lea.sflag [#allocation4], %s228
        %s230 = sand.u32 %s87, 1
        %s231 = smul.addr %s230, 16
        %s232 = scalar_lea.vmem [#allocation7], %s231
        %p233 = pneg %p126
        %p234 = pneg %p123
        %s235 = sand.u32 %s113, 1
        %s236 = scalar_lea.sflag [#allocation9], %s235
        %s237 = sand.u32 %s113, 1
        %s238 = smul.addr %s237, 16
        %s239 = scalar_lea.vmem [#allocation8], %s238
        %s240 = smul.u32 2, %s27
        %s241 = smul.u32 2, %s27
        %s242 = smul.u32 2, %s27
        %s243 = smul.u32 2, %s27
        %v244 = vld [vmem:[%s198] sm:$0xff]
        %v245 = vld [vmem:[%s198 + $0x8] sm:$0xff]
        %246 = vmax.xlane.f32.xlu0 %v244
        %v247 = vpop.xlane.xlu0 %246
        %248 = vmax.xlane.f32.xlu0 %v245
        %v249 = vpop.xlane.xlu0 %248
        %v250 = vsub.f32 %v244, %v247
        %v251 = vsub.f32 %v245, %v249
        %v252 = vmul.f32 %v250, 1.442695
        %v253 = vpow.pop %v252
        %v254 = vmul.f32 %v251, 1.442695
        %v255 = vpow.pop %v254
        %256 = vadd.xlane.f32.xlu0 %v253
        %v257 = vpop.xlane.xlu0 %256
        %258 = vadd.xlane.f32.xlu0 %v255
        %v259 = vpop.xlane.xlu0 %258
        %v260 = vrcp.pop %v257
        %v261 = vrcp.pop %v259
        %v262 = vmul.f32 %v253, %v260
        %v263 = vmul.f32 %v255, %v261
        %264 = vst [vmem:[%s232] sm:$0xff] %v262
        %265 = vst [vmem:[%s232 + $0x8] sm:$0xff] %v263
        %v266 = vmul.f32 %v244, 0.5
        %v267 = vmul.f32 %v245, 0.5
        %v268 = vmul.f32 %v247, 0.5
        %v269 = vmul.f32 %v249, 0.5
        %v270 = vsub.f32 %v266, %v268
        %v271 = vsub.f32 %v267, %v269
        %v272 = vmul.f32 %v270, 1.442695
        %v273 = vpow.pop %v272
        %v274 = vmul.f32 %v271, 1.442695
        %v275 = vpow.pop %v274
        %276 = vadd.xlane.f32.xlu0 %v273
        %v277 = vpop.xlane.xlu0 %276
        %278 = vadd.xlane.f32.xlu0 %v275
        %v279 = vpop.xlane.xlu0 %278
        %v280 = vlog2.pop %v277
        %v281 = vmul.f32 %v280, 0.6931472
        %v282 = vlog2.pop %v279
        %v283 = vmul.f32 %v282, 0.6931472
        %v284 = vadd.f32 %v281, %v268
        %v285 = vadd.f32 %v283, %v269
        %v286 = vld [vmem:[%s207] sm:$0xff]
        %v287 = vld [vmem:[%s207 + $0x8] sm:$0xff]
        %v288 = vlaneseq
        %v289 = vand.u32 %v288, 127
        %290 = vset.pattern.permute.xlu0 0
        %291 = vperm.xlu0 %290, %v286
        %v292 = vpop.permute.xlu0 %291
        %293 = vset.pattern.permute.xlu0 0
        %294 = vperm.xlu0 %293, %v287
        %v295 = vpop.permute.xlu0 %294
        %vm296 = vcmp.eq.s32.totalorder %v289, %v292
        %vm297 = vcmp.eq.s32.totalorder %v289, %v295
        %v298 = vsel %vm296, %v266, 0.0
        %v299 = vsel %vm297, %v267, 0.0
        %300 = vadd.xlane.f32.xlu0 %v298
        %v301 = vpop.xlane.xlu0 %300
        %302 = vadd.xlane.f32.xlu0 %v299
        %v303 = vpop.xlane.xlu0 %302
        %v304 = vsub.f32 %v284, %v301
        %v305 = vsub.f32 %v285, %v303
        %vm306 = vcmask 7168
        %307 = vst.msk [vmem:[%s239] sm:$0xff] %vm306, %v304
        %308 = vst.msk [vmem:[%s239 + $0x8] sm:$0xff] %vm306, %v305
        %s309 = sand.u32 %s87, 1
        %s310 = scalar_lea.sflag [#allocation4], %s309
        %s311 = sand.u32 %s87, 1
        %s312 = smul.addr %s311, 16
        %s313 = scalar_lea.vmem [#allocation7], %s312
        %s314 = sand.u32 %s113, 1
        %s315 = scalar_lea.sflag [#allocation9], %s314
        %s316 = sand.u32 %s113, 1
        %s317 = smul.addr %s316, 16
        %s318 = scalar_lea.vmem [#allocation8], %s317
        // Predicated region
        $region37: #{tpu_custom_call.1} parent=27 // pred_check
          %p319 = pneg %p97
        $region38: #{tpu_custom_call.1} parent=27 // pred_check_branch
          %321 = sbr.rel (%p319) target = $region40
        $region39: #{tpu_custom_call.1} parent=27 // pred_region
          %s322 = smul.u32 2, %s27
          %s324 = ssub.s32 256, 256
          %325 = vsyncadd %s310, %s324
          %s326 = smul.addr %s322, 128
          %s327 = scalar_lea.hbm %s2, %s326
          %s328 = sshll.u32 %s313, 4
          %s329 = int_to_ptr.vmem [resolvable:$true] %s328
          %334 = dma.vmem_to_hbm [thread:$0]  %s329, 256, %s327, %s310, 128, 128, 8
        $region40: #{tpu_custom_call.1} parent=27 // pred_fallthru
          _
        // Predicated region
        $region41: #{tpu_custom_call.1} parent=27 // pred_check
          %p335 = pneg %p123
        $region42: #{tpu_custom_call.1} parent=27 // pred_check_branch
          %337 = sbr.rel (%p335) target = $region44
        $region43: #{tpu_custom_call.1} parent=27 // pred_region
          %s338 = smul.u32 2, %s27
          %s340 = ssub.s32 256, 256
          %341 = vsyncadd %s315, %s340
          %s342 = smul.addr %s338, 128
          %s343 = scalar_lea.hbm %s3, %s342
          %s344 = sshll.u32 %s318, 4
          %s345 = int_to_ptr.vmem [resolvable:$true] %s344
          %350 = dma.vmem_to_hbm [thread:$0]  %s345, 256, %s343, %s315, 128, 128, 8
        $region44: #{tpu_custom_call.1} parent=27 // pred_fallthru
          _
      $region28: #{tpu_custom_call.1} parent=5 // pred_fallthru
        _
      %p351 = scmp.le.s32.totalorder 2, %s22
      // Predicated region
      $region45: #{tpu_custom_call.1} parent=5 // pred_check
        %p352 = pneg %p351
      $region46: #{tpu_custom_call.1} parent=5 // pred_check_branch
        %354 = sbr.rel (%p352) target = $region48
      $region47: #{tpu_custom_call.1} parent=5 // pred_region
        %s355 = ssub.s32 %s22, 2
        // Predicated region
        $region49: #{tpu_custom_call.1} parent=47 // pred_check
          %p356 = pneg %p103
        $region50: #{tpu_custom_call.1} parent=47 // pred_check_branch
          %358 = sbr.rel (%p356) target = $region52
        $region51: #{tpu_custom_call.1} parent=47 // pred_region
          %s359 = sand.u32 %s88, 1
          %s360 = scalar_lea.sflag [#allocation4], %s359
          %s361 = sand.u32 %s88, 1
          %s362 = smul.addr %s361, 16
          %s363 = scalar_lea.vmem [#allocation7], %s362
          %364 = dma.done %s360, 256
        $region52: #{tpu_custom_call.1} parent=47 // pred_fallthru
          _
        // Predicated region
        $region53: #{tpu_custom_call.1} parent=47 // pred_check
          %p365 = pneg %p129
        $region54: #{tpu_custom_call.1} parent=47 // pred_check_branch
          %367 = sbr.rel (%p365) target = $region56
        $region55: #{tpu_custom_call.1} parent=47 // pred_region
          %s368 = sand.u32 %s114, 1
          %s369 = scalar_lea.sflag [#allocation9], %s368
          %s370 = sand.u32 %s114, 1
          %s371 = smul.addr %s370, 16
          %s372 = scalar_lea.vmem [#allocation8], %s371
          %373 = dma.done %s369, 256
        $region56: #{tpu_custom_call.1} parent=47 // pred_fallthru
          _
      $region48: #{tpu_custom_call.1} parent=5 // pred_fallthru
        _
    $region6: #{tpu_custom_call.1} parent=1 // loop_footer
      %s26 = sadd.s32 1, %s22
    $region7: #{tpu_custom_call.1} parent=1 // loop_footer_branch
      %21 = sbr.rel target = $region3
    $region8: #{tpu_custom_call.1} parent=1 // loop_exit
      _
    %374 = vsyncpa [#allocation3], 1
    %s375 = scalar_lea.sflag [#allocation3], 1
    %376 = vsyncpa %s375, 1
    %377 = vsyncpa [#allocation6], 1
    %s378 = scalar_lea.sflag [#allocation6], 1
    %379 = vsyncpa %s378, 1
    %380 = vsyncpa [#allocation4], 1
    %s381 = scalar_lea.sflag [#allocation4], 1
    %382 = vsyncpa %s381, 1
    %383 = vsyncpa [#allocation9], 1
    %s384 = scalar_lea.sflag [#allocation9], 1
    %385 = vsyncpa %s384, 1

</llo_original>
